<compile_context>
chip_gen: v5e
topology: v5e:2x2
jax: 0.10.0
libtpu: 0.0.40
codegen_flags: <defaults>
</compile_context>

<pallas_src>
import jax
import jax.numpy as jnp
import numpy as np
from jax.experimental import pallas as pl
from jax.experimental.pallas import tpu as pltpu

LANE = 128


def _round_up(n, m):
    return ((n + m - 1) // m) * m


def _pad_to(a, shape):
    pads = [(0, s - d) for d, s in zip(a.shape, shape)]
    return jnp.pad(a, pads)


# ---------------------------------------------------------------------------
# Pallas kernel: one batch tile of the Policy MLP (all weights VMEM-resident).
# ---------------------------------------------------------------------------
def policy_kernel(x_ref, w1_ref, b1_ref, w2_ref, b2_ref, w3_ref, b3_ref,
                  mean_ref):
    # x is stored in HBM as f32; cast to the matmul operand dtype in-kernel
    # (VPU cast on a small tile is free; avoids a wrapper HBM pass over x).
    x = x_ref[...].astype(w1_ref.dtype)                              # (Bt, D_in)

    # fc1 + tanh  (MXU accumulates in f32; bias add / tanh in f32)
    h1 = jnp.dot(x, w1_ref[...], preferred_element_type=jnp.float32)
    h1 = jnp.tanh(h1 + b1_ref[...])                                  # (Bt, 128)
    h1 = h1.astype(w2_ref.dtype)

    # fc2 + tanh
    h2 = jnp.dot(h1, w2_ref[...], preferred_element_type=jnp.float32)
    h2 = jnp.tanh(h2 + b2_ref[...])                                  # (Bt, 128)
    h2 = h2.astype(w3_ref.dtype)

    # mean head: compact (Bt, out_dim) store (out_dim == full array last dim)
    mean = jnp.dot(h2, w3_ref[...], preferred_element_type=jnp.float32)
    mean_ref[...] = (mean + b3_ref[...]).astype(mean_ref.dtype)      # (Bt, out)


# ---------------------------------------------------------------------------
# One-time parameter preparation: pad hidden dims to 128 lanes, cast weights
# to the MXU operand dtype.  Call once; reuse the result for every forward.
# ---------------------------------------------------------------------------
def prepare_params(params, *, matmul_dtype=jnp.float32):
    w1, b1, w2, b2, w3, b3, logstd = params
    in_dim = w1.shape[0]
    h1_dim, h2_dim = w1.shape[1], w2.shape[1]        # 120, 84
    out_dim = w3.shape[1]

    h1_p = _round_up(h1_dim, LANE)                   # 128
    h2_p = _round_up(h2_dim, LANE)                   # 128

    # Zero-pad weights/biases so padded lanes stay exactly zero through tanh.
    w1p = _pad_to(w1, (in_dim, h1_p)).astype(matmul_dtype)
    w2p = _pad_to(w2, (h1_p, h2_p)).astype(matmul_dtype)
    w3p = _pad_to(w3, (h2_p, out_dim)).astype(matmul_dtype)   # out_dim unpadded
    b1p = _pad_to(b1.astype(jnp.float32), (1, h1_p))
    b2p = _pad_to(b2.astype(jnp.float32), (1, h2_p))
    b3p = b3.astype(jnp.float32)
    return (w1p, b1p, w2p, b2p, w3p, b3p, logstd.astype(jnp.float32))


# ---------------------------------------------------------------------------
# Wrapper: tiles the batch and calls the fused kernel.
# ---------------------------------------------------------------------------
def policy_forward(x, prepared_params, *, batch_tile=2048):
    """x: (B, input_shape) float32.  prepared_params from prepare_params().
    Returns (action_mean, action_logstd) with the module's semantics."""
    w1p, b1p, w2p, b2p, w3p, b3p, logstd = prepared_params
    B, in_dim = x.shape
    assert in_dim == w1p.shape[0], "input dim mismatch with prepared params"
    h1_p, h2_p = w1p.shape[1], w2p.shape[1]
    out_dim = w3p.shape[1]

    # Batch tiling (sublane-aligned).  Prefer >= 2 grid steps when the batch
    # allows so v7x's second TensorCore shares the "parallel" batch axis.
    B8 = _round_up(B, 8)
    bt = min(_round_up(batch_tile, 8), B8)
    if bt == B8 and B8 >= 16:
        bt = _round_up(B8 // 2, 8)
    Bp = _round_up(B, bt)

    xp = x.astype(jnp.float32)
    if Bp != B:
        xp = _pad_to(xp, (Bp, in_dim))

    grid = (Bp // bt,)

    op_bytes = jnp.dtype(w1p.dtype).itemsize
    w_elems = in_dim * h1_p + h1_p * h2_p + h2_p * out_dim
    w_bytes = w_elems * op_bytes + (h1_p + h2_p + out_dim) * 4
    flops = 2 * Bp * w_elems
    transcendentals = Bp * (h1_p + h2_p)
    bytes_accessed = Bp * in_dim * 4 + Bp * out_dim * 4 + w_bytes

    # Rough VMEM footprint: double-buffered x / mean tiles + resident weights
    # + f32 intermediates.  Only raise the scoped limit when actually needed
    # (matters on v5e's 16 MiB default with very large batch tiles).
    vmem_needed = (2 * bt * (in_dim + out_dim) * 4 + 2 * w_bytes
                   + 2 * bt * max(h1_p, h2_p) * 4)
    cp_kwargs = dict(dimension_semantics=("parallel",))
    if vmem_needed > 12 * 1024 * 1024:
        cp_kwargs["vmem_limit_bytes"] = int(min(2 * vmem_needed, 64 * 1024 * 1024))

    mean_p = pl.pallas_call(
        policy_kernel,
        out_shape=jax.ShapeDtypeStruct((Bp, out_dim), jnp.float32),
        grid=grid,
        in_specs=[
            pl.BlockSpec((bt, in_dim), lambda i: (i, 0)),    # x streams per tile
            pl.BlockSpec((in_dim, h1_p), lambda i: (0, 0)),  # weights resident
            pl.BlockSpec((1, h1_p), lambda i: (0, 0)),
            pl.BlockSpec((h1_p, h2_p), lambda i: (0, 0)),
            pl.BlockSpec((1, h2_p), lambda i: (0, 0)),
            pl.BlockSpec((h2_p, out_dim), lambda i: (0, 0)),
            pl.BlockSpec((1, out_dim), lambda i: (0, 0)),
        ],
        out_specs=pl.BlockSpec((bt, out_dim), lambda i: (i, 0)),
        compiler_params=pltpu.CompilerParams(**cp_kwargs),
        cost_estimate=pl.CostEstimate(
            flops=int(flops),
            transcendentals=int(transcendentals),
            bytes_accessed=int(bytes_accessed)),
    )(xp, w1p, b1p, w2p, b2p, w3p, b3p)

    mean = mean_p if Bp == B else mean_p[:B]
    # logstd = self.logstd.expand_as(action_mean): pure data movement.
    logstd_out = jnp.broadcast_to(logstd, (B, out_dim)).astype(jnp.float32)
    return mean, logstd_out


# ---------------------------------------------------------------------------
# Deterministic parameter initialization (mimics the PyTorch module's shapes).
# ---------------------------------------------------------------------------
def _orthogonal(key, out_f, in_f):
    # torch.nn.init.orthogonal_ on weight of shape (out_f, in_f), gain=1
    a = jax.random.normal(key, (max(out_f, in_f), min(out_f, in_f)), jnp.float32)
    q, r = jnp.linalg.qr(a)
    d = jnp.sign(jnp.diag(r))
    d = jnp.where(d == 0, 1.0, d)        # avoid zeroing a column when diag==0
    q = q * d
    if out_f < in_f:
        q = q.T
    return q[:out_f, :in_f]


def init_params(key, input_shape, output_shape):
    k1, k2, k3, kb1, kb2, kb3 = jax.random.split(key, 6)
    # PyTorch weight layout is (out, in); transpose to (in, out) for x @ W.
    w1 = _orthogonal(k1, 120, input_shape).T            # (input_shape, 120)
    w2 = _orthogonal(k2, 84, 120).T                     # (120, 84)
    w3 = _orthogonal(k3, output_shape, 84).T            # (84, output_shape)
    # PyTorch Linear default bias init: U(-1/sqrt(fan_in), 1/sqrt(fan_in))
    b1 = jax.random.uniform(kb1, (1, 120), jnp.float32,
                            -1.0 / np.sqrt(input_shape), 1.0 / np.sqrt(input_shape))
    b2 = jax.random.uniform(kb2, (1, 84), jnp.float32,
                            -1.0 / np.sqrt(120), 1.0 / np.sqrt(120))
    b3 = jax.random.uniform(kb3, (1, output_shape), jnp.float32,
                            -1.0 / np.sqrt(84), 1.0 / np.sqrt(84))
    logstd = jnp.zeros((1, output_shape), jnp.float32)  # nn.Parameter(zeros)
    return (w1, b1, w2, b2, w3, b3, logstd)


# ---------------------------------------------------------------------------
# Pure-JAX reference for verification.
# ---------------------------------------------------------------------------
def policy_forward_ref(x, params):
    w1, b1, w2, b2, w3, b3, logstd = params
    h1 = jnp.tanh(x @ w1 + b1)
    h2 = jnp.tanh(h1 @ w2 + b2)
    mean = h2 @ w3 + b3
    return mean, jnp.broadcast_to(logstd, mean.shape)


if __name__ == "__main__":
    key = jax.random.PRNGKey(0)
    kx, kp = jax.random.split(key)

    batch = 12           # exercises row padding (Bp=16) and a 2-step grid
    input_shape = 16     # small synthetic observation dim
    output_shape = 6     # small synthetic action dim

    params = init_params(kp, input_shape, output_shape)
    x = jax.random.normal(kx, (batch, input_shape), jnp.float32)

    mean_ref, logstd_ref = policy_forward_ref(x, params)

    # f32 operand path (exact vs reference)
    prepared_f32 = prepare_params(params, matmul_dtype=jnp.float32)
    mean, logstd = policy_forward(x, prepared_f32)
    jax.block_until_ready((mean, logstd))
    np.testing.assert_allclose(np.asarray(mean), np.asarray(mean_ref),
                               rtol=1e-5, atol=1e-5)
    np.testing.assert_allclose(np.asarray(logstd), np.asarray(logstd_ref),
                               rtol=1e-6, atol=1e-6)

    # bf16 operand path (v6e/v7x MXU fast path); f32 accumulation / epilogue.
    prepared_bf16 = prepare_params(params, matmul_dtype=jnp.bfloat16)
    mean_bf16, _ = policy_forward(x, prepared_bf16)
    jax.block_until_ready(mean_bf16)
    np.testing.assert_allclose(np.asarray(mean_bf16), np.asarray(mean_ref),
                               rtol=5e-2, atol=5e-2)

    print("KERNEL_OK")
</pallas_src>

<mosaic_0001>
module attributes {stable_mosaic.version = 11 : i64} {
  func.func @policy_kernel(%arg0: i32, %arg1: memref<8x16xf32, #tpu.memory_space<vmem>>, %arg2: memref<16x128xf32, #tpu.memory_space<vmem>>, %arg3: memref<1x128xf32, #tpu.memory_space<vmem>>, %arg4: memref<128x128xf32, #tpu.memory_space<vmem>>, %arg5: memref<1x128xf32, #tpu.memory_space<vmem>>, %arg6: memref<128x6xf32, #tpu.memory_space<vmem>>, %arg7: memref<1x6xf32, #tpu.memory_space<vmem>>, %arg8: memref<8x6xf32, #tpu.memory_space<vmem>>) attributes {dimension_semantics = [#tpu.dimension_semantics<parallel>], iteration_bounds = array<i64: 2>, scalar_prefetch = 0 : i64, scratch_operands = 0 : i64, tpu.core_type = #tpu.core_type<tc>, window_params = [{transform_indices = @transform_0, window_bounds = array<i64: 8, 16>}, {pipeline_mode = #tpu.pipeline_mode<synchronous>, transform_indices = @transform_1, window_bounds = array<i64: 16, 128>}, {pipeline_mode = #tpu.pipeline_mode<synchronous>, transform_indices = @transform_2, window_bounds = array<i64: 1, 128>}, {pipeline_mode = #tpu.pipeline_mode<synchronous>, transform_indices = @transform_3, window_bounds = array<i64: 128, 128>}, {pipeline_mode = #tpu.pipeline_mode<synchronous>, transform_indices = @transform_4, window_bounds = array<i64: 1, 128>}, {pipeline_mode = #tpu.pipeline_mode<synchronous>, transform_indices = @transform_5, window_bounds = array<i64: 128, 6>}, {pipeline_mode = #tpu.pipeline_mode<synchronous>, transform_indices = @transform_6, window_bounds = array<i64: 1, 6>}, {transform_indices = @transform_7, window_bounds = array<i64: 8, 6>}]} {
    %c0 = arith.constant 0 : index
    %c0_0 = arith.constant 0 : index
    %0 = vector.load %arg1[%c0, %c0_0] : memref<8x16xf32, #tpu.memory_space<vmem>>, vector<8x16xf32>
    %c0_1 = arith.constant 0 : index
    %c0_2 = arith.constant 0 : index
    %1 = vector.load %arg2[%c0_1, %c0_2] : memref<16x128xf32, #tpu.memory_space<vmem>>, vector<16x128xf32>
    %cst = arith.constant dense<0.000000e+00> : vector<8x128xf32>
    %2 = tpu.matmul %0, %1, %cst {dimension_numbers = #tpu.dot_dimension_numbers<[1], [0], [0], [1], [0, 0, 1, 1], [], []>} : vector<8x16xf32>, vector<16x128xf32>, vector<8x128xf32> -> vector<8x128xf32>
    %c0_3 = arith.constant 0 : index
    %c0_4 = arith.constant 0 : index
    %3 = vector.load %arg3[%c0_3, %c0_4] : memref<1x128xf32, #tpu.memory_space<vmem>>, vector<1x128xf32>
    %4 = vector.broadcast %3 : vector<1x128xf32> to vector<8x128xf32>
    %5 = arith.addf %2, %4 : vector<8x128xf32>
    %6 = math.tanh %5 : vector<8x128xf32>
    %c0_5 = arith.constant 0 : index
    %c0_6 = arith.constant 0 : index
    %7 = vector.load %arg4[%c0_5, %c0_6] : memref<128x128xf32, #tpu.memory_space<vmem>>, vector<128x128xf32>
    %cst_7 = arith.constant dense<0.000000e+00> : vector<8x128xf32>
    %8 = tpu.matmul %6, %7, %cst_7 {dimension_numbers = #tpu.dot_dimension_numbers<[1], [0], [0], [1], [0, 0, 1, 1], [], []>} : vector<8x128xf32>, vector<128x128xf32>, vector<8x128xf32> -> vector<8x128xf32>
    %c0_8 = arith.constant 0 : index
    %c0_9 = arith.constant 0 : index
    %9 = vector.load %arg5[%c0_8, %c0_9] : memref<1x128xf32, #tpu.memory_space<vmem>>, vector<1x128xf32>
    %10 = vector.broadcast %9 : vector<1x128xf32> to vector<8x128xf32>
    %11 = arith.addf %8, %10 : vector<8x128xf32>
    %12 = math.tanh %11 : vector<8x128xf32>
    %c0_10 = arith.constant 0 : index
    %c0_11 = arith.constant 0 : index
    %13 = vector.load %arg6[%c0_10, %c0_11] : memref<128x6xf32, #tpu.memory_space<vmem>>, vector<128x6xf32>
    %cst_12 = arith.constant dense<0.000000e+00> : vector<8x6xf32>
    %14 = tpu.matmul %12, %13, %cst_12 {dimension_numbers = #tpu.dot_dimension_numbers<[1], [0], [0], [1], [0, 0, 1, 1], [], []>} : vector<8x128xf32>, vector<128x6xf32>, vector<8x6xf32> -> vector<8x6xf32>
    %c0_13 = arith.constant 0 : index
    %c0_14 = arith.constant 0 : index
    %15 = vector.load %arg7[%c0_13, %c0_14] : memref<1x6xf32, #tpu.memory_space<vmem>>, vector<1x6xf32>
    %16 = vector.broadcast %15 : vector<1x6xf32> to vector<8x6xf32>
    %17 = arith.addf %14, %16 : vector<8x6xf32>
    %c0_15 = arith.constant 0 : index
    %c0_16 = arith.constant 0 : index
    %18 = vector.load %arg8[%c0_15, %c0_16] : memref<8x6xf32, #tpu.memory_space<vmem>>, vector<8x6xf32>
    tpu.vector_store %arg8[%c0_15, %c0_16], %17 {strides = array<i32>} : memref<8x6xf32, #tpu.memory_space<vmem>>, vector<8x6xf32>,
    return
  }
  func.func @transform_0(%arg0: i32) -> (i32, i32) {
    %c0_i32 = arith.constant 0 : i32
    %c0_i32_0 = arith.constant 0 : i32
    return %arg0, %c0_i32 : i32, i32
  }
  func.func @transform_1(%arg0: i32) -> (i32, i32) {
    %c0_i32 = arith.constant 0 : i32
    %c0_i32_0 = arith.constant 0 : i32
    %c0_i32_1 = arith.constant 0 : i32
    return %c0_i32, %c0_i32_0 : i32, i32
  }
  func.func @transform_2(%arg0: i32) -> (i32, i32) {
    %c0_i32 = arith.constant 0 : i32
    %c0_i32_0 = arith.constant 0 : i32
    %c0_i32_1 = arith.constant 0 : i32
    return %c0_i32, %c0_i32_0 : i32, i32
  }
  func.func @transform_3(%arg0: i32) -> (i32, i32) {
    %c0_i32 = arith.constant 0 : i32
    %c0_i32_0 = arith.constant 0 : i32
    %c0_i32_1 = arith.constant 0 : i32
    return %c0_i32, %c0_i32_0 : i32, i32
  }
  func.func @transform_4(%arg0: i32) -> (i32, i32) {
    %c0_i32 = arith.constant 0 : i32
    %c0_i32_0 = arith.constant 0 : i32
    %c0_i32_1 = arith.constant 0 : i32
    return %c0_i32, %c0_i32_0 : i32, i32
  }
  func.func @transform_5(%arg0: i32) -> (i32, i32) {
    %c0_i32 = arith.constant 0 : i32
    %c0_i32_0 = arith.constant 0 : i32
    %c0_i32_1 = arith.constant 0 : i32
    return %c0_i32, %c0_i32_0 : i32, i32
  }
  func.func @transform_6(%arg0: i32) -> (i32, i32) {
    %c0_i32 = arith.constant 0 : i32
    %c0_i32_0 = arith.constant 0 : i32
    %c0_i32_1 = arith.constant 0 : i32
    return %c0_i32, %c0_i32_0 : i32, i32
  }
  func.func @transform_7(%arg0: i32) -> (i32, i32) {
    %c0_i32 = arith.constant 0 : i32
    %c0_i32_0 = arith.constant 0 : i32
    return %arg0, %c0_i32 : i32, i32
  }
}

</mosaic_0001>

<llo_original>
// kernel: tpu_custom_call.1
$region0: #{tpu_custom_call.1}
  #allocation0 [shape = 'u32[]', space=smem, size = 0x4, offset = 0x4, fixed_abs, tag = 'smem constant byte address 0x4 - core index']
  #allocation1 [shape = 'u32[72,128]{1,0:T(1,128)}', space=vmem, size = 0x9000, scoped, tag = 'internal scratch']
  %s0 = inlined_call_operand.hbm [shape: f32[16,16], index: 0, kind: input, shape index: {}]
  %s1 = inlined_call_operand.hbm [shape: f32[16,128], index: 1, kind: input, shape index: {}]
  %s2 = inlined_call_operand.vmem [shape: f32[1,128], index: 2, kind: input, shape index: {}]
  %s3 = inlined_call_operand.vmem [shape: f32[128,128], index: 3, kind: input, shape index: {}]
  %s4 = inlined_call_operand.vmem [shape: f32[1,128], index: 4, kind: input, shape index: {}]
  %s5 = inlined_call_operand.vmem [shape: f32[128,6], index: 5, kind: input, shape index: {}]
  %s6 = inlined_call_operand.vmem [shape: f32[1,6], index: 6, kind: input, shape index: {}]
  %s7 = inlined_call_operand.vmem [shape: f32[16,6], index: 7, kind: output, shape index: {}]
  %s8 = sld [smem:[#allocation0]]
  $region69: #{tpu_custom_call.1} parent=0
    _
  %s10 = ssub.s32 1, %s8
  %s11 = scalar_select 0, %s10, %s8
  $region1: #{tpu_custom_call.1} parent=0
    #allocation2 [shape = 'u8[8192]{0}', space=vmem, size = 0x2000, scoped, tag = 'input window, operand 0']
    #allocation3 [shape = 's32[2]{0}', space=sflag, size = 0x8, scoped, tag = 'scoped memory for tpu_custom_call.1']
    #allocation4 [shape = 'u8[8192]{0}', space=vmem, size = 0x2000, scoped, tag = 'input window, operand 1, single buffered']
    #allocation5 [shape = 's32[1]{0}', space=sflag, size = 0x4, scoped, tag = 'scoped memory for tpu_custom_call.1']
    %12 = vsyncpa [#allocation3], 0
    %s13 = scalar_lea.sflag [#allocation3], 1
    %14 = vsyncpa %s13, 0
    %15 = vsyncpa [#allocation5], 0
    loop: start=0, step=1, limit=4
    $region2: #{tpu_custom_call.1} parent=1 // loop_pre_header
      _
    $region3: #{tpu_custom_call.1} parent=1 // loop_header
      %s17 = sphi 0, %s21
      %p18 = scmp.ge.s32.totalorder %s17, 4
      %s27 = sphi 0, %s29
      %s30 = sphi 0, %s27
      %s31 = sphi 0, %s30
      %s47 = sphi 0, %s31
      %s51 = sphi 0, %s51
      %s53 = sphi 0, %s51
      %s54 = sphi 0, %s53
      %s68 = sphi 0, %s54
      %s72 = sphi 0, %s72
      %s74 = sphi 0, %s72
      %s75 = sphi 0, %s74
      %s89 = sphi 0, %s75
      %s93 = sphi 0, %s93
      %s95 = sphi 0, %s93
      %s96 = sphi 0, %s95
      %s110 = sphi 0, %s96
      %s114 = sphi 0, %s114
      %s116 = sphi 0, %s114
      %s117 = sphi 0, %s116
      %s131 = sphi 0, %s117
      %s135 = sphi 0, %s135
      %s137 = sphi 0, %s135
      %s138 = sphi 0, %s137
      %s152 = sphi 0, %s138
      %s156 = sphi 0, %s156
      %s158 = sphi 0, %s156
      %s159 = sphi 0, %s158
      %s173 = sphi 0, %s159
      %s179 = sphi 0, %s181
      %s182 = sphi 0, %s179
      %s183 = sphi 0, %s182
      %s199 = sphi 0, %s183
    $region4: #{tpu_custom_call.1} parent=1 // loop_header_branch
      %20 = sbr.rel (%p18) target = $region8
    $region5: #{tpu_custom_call.1} parent=1 // loop_body
      %s22 = ssub.s32 %s17, 1
      %s23 = ssub.s32 %s17, 2
      %s24 = sadd.s32 %s17, 1
      %s25 = ssub.s32 %s17, %s24
      %p26 = scmp.eq.s32.totalorder %s25, 0
      %s28 = sadd.s32 %s27, 1
      %s29 = scalar_select %p26, %s27, %s28
      %p32 = pneg %p26
      %p33 = scmp.eq.s32.totalorder %s17, 1
      %p34 = por %p32, %p33
      %p35 = scmp.ne.s32.totalorder %s27, %s30
      %p36 = scmp.eq.s32.totalorder %s17, 0
      %p37 = por %p35, %p36
      %p38 = scmp.ne.s32.totalorder %s27, %s30
      %p39 = scmp.eq.s32.totalorder %s22, 1
      %p40 = por %p38, %p39
      %p41 = scmp.ne.s32.totalorder %s30, %s31
      %p42 = scmp.eq.s32.totalorder %s22, 0
      %p43 = por %p41, %p42
      %p44 = scmp.ne.s32.totalorder %s30, %s31
      %p45 = scmp.eq.s32.totalorder %s23, 1
      %p46 = por %p44, %p45
      %p48 = scmp.ne.s32.totalorder %s31, %s47
      %p49 = scmp.eq.s32.totalorder %s23, 0
      %p50 = por %p48, %p49
      %s52 = sadd.s32 %s51, 1
      %p55 = scmp.eq.s32.totalorder %s17, 1
      %p56 = scmp.ne.s32.totalorder %s51, %s53
      %p57 = scmp.eq.s32.totalorder %s17, 0
      %p58 = por %p56, %p57
      %p59 = scmp.ne.s32.totalorder %s51, %s53
      %p60 = scmp.eq.s32.totalorder %s22, 1
      %p61 = por %p59, %p60
      %p62 = scmp.ne.s32.totalorder %s53, %s54
      %p63 = scmp.eq.s32.totalorder %s22, 0
      %p64 = por %p62, %p63
      %p65 = scmp.ne.s32.totalorder %s53, %s54
      %p66 = scmp.eq.s32.totalorder %s23, 1
      %p67 = por %p65, %p66
      %p69 = scmp.ne.s32.totalorder %s54, %s68
      %p70 = scmp.eq.s32.totalorder %s23, 0
      %p71 = por %p69, %p70
      %s73 = sadd.s32 %s72, 1
      %p76 = scmp.eq.s32.totalorder %s17, 1
      %p77 = scmp.ne.s32.totalorder %s72, %s74
      %p78 = scmp.eq.s32.totalorder %s17, 0
      %p79 = por %p77, %p78
      %p80 = scmp.ne.s32.totalorder %s72, %s74
      %p81 = scmp.eq.s32.totalorder %s22, 1
      %p82 = por %p80, %p81
      %p83 = scmp.ne.s32.totalorder %s74, %s75
      %p84 = scmp.eq.s32.totalorder %s22, 0
      %p85 = por %p83, %p84
      %p86 = scmp.ne.s32.totalorder %s74, %s75
      %p87 = scmp.eq.s32.totalorder %s23, 1
      %p88 = por %p86, %p87
      %p90 = scmp.ne.s32.totalorder %s75, %s89
      %p91 = scmp.eq.s32.totalorder %s23, 0
      %p92 = por %p90, %p91
      %s94 = sadd.s32 %s93, 1
      %p97 = scmp.eq.s32.totalorder %s17, 1
      %p98 = scmp.ne.s32.totalorder %s93, %s95
      %p99 = scmp.eq.s32.totalorder %s17, 0
      %p100 = por %p98, %p99
      %p101 = scmp.ne.s32.totalorder %s93, %s95
      %p102 = scmp.eq.s32.totalorder %s22, 1
      %p103 = por %p101, %p102
      %p104 = scmp.ne.s32.totalorder %s95, %s96
      %p105 = scmp.eq.s32.totalorder %s22, 0
      %p106 = por %p104, %p105
      %p107 = scmp.ne.s32.totalorder %s95, %s96
      %p108 = scmp.eq.s32.totalorder %s23, 1
      %p109 = por %p107, %p108
      %p111 = scmp.ne.s32.totalorder %s96, %s110
      %p112 = scmp.eq.s32.totalorder %s23, 0
      %p113 = por %p111, %p112
      %s115 = sadd.s32 %s114, 1
      %p118 = scmp.eq.s32.totalorder %s17, 1
      %p119 = scmp.ne.s32.totalorder %s114, %s116
      %p120 = scmp.eq.s32.totalorder %s17, 0
      %p121 = por %p119, %p120
      %p122 = scmp.ne.s32.totalorder %s114, %s116
      %p123 = scmp.eq.s32.totalorder %s22, 1
      %p124 = por %p122, %p123
      %p125 = scmp.ne.s32.totalorder %s116, %s117
      %p126 = scmp.eq.s32.totalorder %s22, 0
      %p127 = por %p125, %p126
      %p128 = scmp.ne.s32.totalorder %s116, %s117
      %p129 = scmp.eq.s32.totalorder %s23, 1
      %p130 = por %p128, %p129
      %p132 = scmp.ne.s32.totalorder %s117, %s131
      %p133 = scmp.eq.s32.totalorder %s23, 0
      %p134 = por %p132, %p133
      %s136 = sadd.s32 %s135, 1
      %p139 = scmp.eq.s32.totalorder %s17, 1
      %p140 = scmp.ne.s32.totalorder %s135, %s137
      %p141 = scmp.eq.s32.totalorder %s17, 0
      %p142 = por %p140, %p141
      %p143 = scmp.ne.s32.totalorder %s135, %s137
      %p144 = scmp.eq.s32.totalorder %s22, 1
      %p145 = por %p143, %p144
      %p146 = scmp.ne.s32.totalorder %s137, %s138
      %p147 = scmp.eq.s32.totalorder %s22, 0
      %p148 = por %p146, %p147
      %p149 = scmp.ne.s32.totalorder %s137, %s138
      %p150 = scmp.eq.s32.totalorder %s23, 1
      %p151 = por %p149, %p150
      %p153 = scmp.ne.s32.totalorder %s138, %s152
      %p154 = scmp.eq.s32.totalorder %s23, 0
      %p155 = por %p153, %p154
      %s157 = sadd.s32 %s156, 1
      %p160 = scmp.eq.s32.totalorder %s17, 1
      %p161 = scmp.ne.s32.totalorder %s156, %s158
      %p162 = scmp.eq.s32.totalorder %s17, 0
      %p163 = por %p161, %p162
      %p164 = scmp.ne.s32.totalorder %s156, %s158
      %p165 = scmp.eq.s32.totalorder %s22, 1
      %p166 = por %p164, %p165
      %p167 = scmp.ne.s32.totalorder %s158, %s159
      %p168 = scmp.eq.s32.totalorder %s22, 0
      %p169 = por %p167, %p168
      %p170 = scmp.ne.s32.totalorder %s158, %s159
      %p171 = scmp.eq.s32.totalorder %s23, 1
      %p172 = por %p170, %p171
      %p174 = scmp.ne.s32.totalorder %s159, %s173
      %p175 = scmp.eq.s32.totalorder %s23, 0
      %p176 = por %p174, %p175
      %s177 = ssub.s32 %s17, %s24
      %p178 = scmp.eq.s32.totalorder %s177, 0
      %s180 = sadd.s32 %s179, 1
      %s181 = scalar_select %p178, %s179, %s180
      %p184 = pneg %p178
      %p185 = scmp.eq.s32.totalorder %s17, 1
      %p186 = por %p184, %p185
      %p187 = scmp.ne.s32.totalorder %s179, %s182
      %p188 = scmp.eq.s32.totalorder %s17, 0
      %p189 = por %p187, %p188
      %p190 = scmp.ne.s32.totalorder %s179, %s182
      %p191 = scmp.eq.s32.totalorder %s22, 1
      %p192 = por %p190, %p191
      %p193 = scmp.ne.s32.totalorder %s182, %s183
      %p194 = scmp.eq.s32.totalorder %s22, 0
      %p195 = por %p193, %p194
      %p196 = scmp.ne.s32.totalorder %s182, %s183
      %p197 = scmp.eq.s32.totalorder %s23, 1
      %p198 = por %p196, %p197
      %p200 = scmp.ne.s32.totalorder %s183, %s199
      %p201 = scmp.eq.s32.totalorder %s23, 0
      %p202 = por %p200, %p201
      %p203 = scmp.le.s32.totalorder 1, %s17
      %p204 = scmp.lt.s32.totalorder %s17, 3
      %p205 = pnand %p203, %p204
      %p206 = pneg %p205
      // Predicated region
      $region9: #{tpu_custom_call.1} parent=5 // pred_check
        _
      $region10: #{tpu_custom_call.1} parent=5 // pred_check_branch
        %208 = sbr.rel (%p205) target = $region12
      $region11: #{tpu_custom_call.1} parent=5 // pred_region
        %s209 = ssub.s32 %s17, 1
        // Predicated region
        $region13: #{tpu_custom_call.1} parent=11 // pred_check
          %p210 = pneg %p64
        $region14: #{tpu_custom_call.1} parent=11 // pred_check_branch
          %212 = sbr.rel (%p210) target = $region16
        $region15: #{tpu_custom_call.1} parent=11 // pred_region
          %214 = vsyncadd [#allocation5], 0
          %s215 = sshll.u32 %s1, 4
          %s216 = int_to_ptr.hbm [resolvable:$true] %s215
          %s217 = sshll.u32 [#allocation4], 4
          %s218 = int_to_ptr.vmem [resolvable:$true] %s217
          %223 = dma.hbm_to_vmem [thread:$0]  %s216, 256, %s218, [#allocation5], 128, 128, 8
        $region16: #{tpu_custom_call.1} parent=11 // pred_fallthru
          _
        // Predicated region
        $region17: #{tpu_custom_call.1} parent=11 // pred_check
          %p224 = pneg %p85
        $region18: #{tpu_custom_call.1} parent=11 // pred_check_branch
          %226 = sbr.rel (%p224) target = $region20
        $region19: #{tpu_custom_call.1} parent=11 // pred_region
          _
        $region20: #{tpu_custom_call.1} parent=11 // pred_fallthru
          _
        // Predicated region
        $region21: #{tpu_custom_call.1} parent=11 // pred_check
          %p227 = pneg %p106
        $region22: #{tpu_custom_call.1} parent=11 // pred_check_branch
          %229 = sbr.rel (%p227) target = $region24
        $region23: #{tpu_custom_call.1} parent=11 // pred_region
          _
        $region24: #{tpu_custom_call.1} parent=11 // pred_fallthru
          _
        // Predicated region
        $region25: #{tpu_custom_call.1} parent=11 // pred_check
          %p230 = pneg %p127
        $region26: #{tpu_custom_call.1} parent=11 // pred_check_branch
          %232 = sbr.rel (%p230) target = $region28
        $region27: #{tpu_custom_call.1} parent=11 // pred_region
          _
        $region28: #{tpu_custom_call.1} parent=11 // pred_fallthru
          _
        // Predicated region
        $region29: #{tpu_custom_call.1} parent=11 // pred_check
          %p233 = pneg %p148
        $region30: #{tpu_custom_call.1} parent=11 // pred_check_branch
          %235 = sbr.rel (%p233) target = $region32
        $region31: #{tpu_custom_call.1} parent=11 // pred_region
          _
        $region32: #{tpu_custom_call.1} parent=11 // pred_fallthru
          _
        // Predicated region
        $region33: #{tpu_custom_call.1} parent=11 // pred_check
          %p236 = pneg %p169
        $region34: #{tpu_custom_call.1} parent=11 // pred_check_branch
          %238 = sbr.rel (%p236) target = $region36
        $region35: #{tpu_custom_call.1} parent=11 // pred_region
          _
        $region36: #{tpu_custom_call.1} parent=11 // pred_fallthru
          _
      $region12: #{tpu_custom_call.1} parent=5 // pred_fallthru
        _
      %p239 = scmp.lt.s32.totalorder %s17, 2
      // Predicated region
      $region37: #{tpu_custom_call.1} parent=5 // pred_check
        %p240 = pneg %p239
      $region38: #{tpu_custom_call.1} parent=5 // pred_check_branch
        %242 = sbr.rel (%p240) target = $region40
      $region39: #{tpu_custom_call.1} parent=5 // pred_region
        // Predicated region
        $region41: #{tpu_custom_call.1} parent=39 // pred_check
          %p243 = pneg %p37
        $region42: #{tpu_custom_call.1} parent=39 // pred_check_branch
          %245 = sbr.rel (%p243) target = $region44
        $region43: #{tpu_custom_call.1} parent=39 // pred_region
          %s246 = sand.u32 %s27, 1
          %s247 = scalar_lea.sflag [#allocation3], %s246
          %s248 = sand.u32 %s27, 1
          %s249 = smul.addr %s248, 8
          %s250 = scalar_lea.vmem [#allocation2], %s249
          %252 = vsyncadd %s247, 0
          %s253 = smul.addr %s17, 8
          %s254 = scalar_lea.hbm %s0, %s253
          %s256 = sshll.u32 %s254, 4
          %s257 = int_to_ptr.hbm [resolvable:$true] %s256
          %s258 = sshll.u32 %s250, 4
          %s259 = int_to_ptr.vmem [resolvable:$true] %s258
          %261 = dma.hbm_to_vmem [thread:$0]  %s257, 128, %s259, %s247
        $region44: #{tpu_custom_call.1} parent=39 // pred_fallthru
          _
      $region40: #{tpu_custom_call.1} parent=5 // pred_fallthru
        _
      %p262 = scmp.le.s32.totalorder 1, %s17
      %p263 = scmp.lt.s32.totalorder %s17, 3
      %p264 = pnand %p262, %p263
      %p265 = pneg %p264
      // Predicated region
      $region45: #{tpu_custom_call.1} parent=5 // pred_check
        _
      $region46: #{tpu_custom_call.1} parent=5 // pred_check_branch
        %267 = sbr.rel (%p264) target = $region48
      $region47: #{tpu_custom_call.1} parent=5 // pred_region
        %s268 = ssub.s32 %s17, 1
        %s269 = sand.u32 %s30, 1
        %s270 = scalar_lea.sflag [#allocation3], %s269
        %s271 = sand.u32 %s30, 1
        %s272 = smul.addr %s271, 8
        %s273 = scalar_lea.vmem [#allocation2], %s272
        // Predicated region
        $region49: #{tpu_custom_call.1} parent=47 // pred_check
          %p274 = pneg %p43
        $region50: #{tpu_custom_call.1} parent=47 // pred_check_branch
          %276 = sbr.rel (%p274) target = $region52
        $region51: #{tpu_custom_call.1} parent=47 // pred_region
          %278 = dma.done %s270, 128
        $region52: #{tpu_custom_call.1} parent=47 // pred_fallthru
          _
        // Predicated region
        $region53: #{tpu_custom_call.1} parent=47 // pred_check
          %p279 = pneg %p64
        $region54: #{tpu_custom_call.1} parent=47 // pred_check_branch
          %281 = sbr.rel (%p279) target = $region56
        $region55: #{tpu_custom_call.1} parent=47 // pred_region
          %283 = dma.done [#allocation5], 256
        $region56: #{tpu_custom_call.1} parent=47 // pred_fallthru
          _
        %s284 = sand.u32 %s30, 1
        %s285 = scalar_lea.sflag [#allocation3], %s284
        %s286 = sand.u32 %s30, 1
        %s287 = smul.addr %s286, 8
        %s288 = scalar_lea.vmem [#allocation2], %s287
        %p289 = pneg %p43
        %p290 = pneg %p40
        %p291 = pneg %p64
        %p292 = pneg %p61
        %p293 = pneg %p85
        %p294 = pneg %p82
        %p295 = pneg %p106
        %p296 = pneg %p103
        %p297 = pneg %p127
        %p298 = pneg %p124
        %p299 = pneg %p148
        %p300 = pneg %p145
        %p301 = pneg %p169
        %p302 = pneg %p166
        %p303 = pneg %p195
        %p304 = pneg %p192
        %p305 = scmp.lt.s32.totalorder %s22, 1
        %s306 = scalar_select %p305, %s22, 1
        %s307 = smul.addr %s306, 8
        %s308 = scalar_lea.vmem %s7, %s307
        %p309 = scmp.lt.s32.totalorder %s22, 1
        %s310 = scalar_select %p309, %s22, 1
        %s311 = smul.addr %s310, 8
        %s312 = scalar_lea.vmem %s7, %s311
        %v313 = vld [vmem:[%s273] sm:$0xff]
        %v314 = vld [vmem:[#allocation4] sm:$0xff]
        %v315 = vld [vmem:[#allocation4 + $0x8] sm:$0xff]
        %v316 = vld [vmem:[%s2] sm:$0x1]
        %v318 = vperm.slane %v316, 0
        %vm320 = vcmask 130048
        %v322 = vsel %vm320, %v313, 0
        %324 = vmatpush.msra.mxu0 0.0
        %325 = vmatpush.msra.mxu0 0.0
        %326 = vmatpush.msra.mxu0 0.0
        %327 = vmatpush.msra.mxu0 0.0
        %328 = vmatpush.msra.mxu0 0.0
        %329 = vmatpush.msra.mxu0 0.0
        %330 = vmatpush.msra.mxu0 0.0
        %331 = vmatpush.msra.mxu0 0.0
        %332 = vmatpush.msra.mxu0 0.0
        %333 = vmatpush.msra.mxu0 0.0
        %334 = vmatpush.msra.mxu0 0.0
        %335 = vmatpush.msra.mxu0 0.0
        %336 = vmatpush.msra.mxu0 0.0
        %337 = vmatpush.msra.mxu0 0.0
        %338 = vmatpush.msra.mxu0 %v315
        %339 = vmatpush.msra.mxu0 %v314
        %340 = vmatmul.f32.gmra.mxu0 %v322
        %v341 = vpop.f32.mrf.mxu0
        %v342 = vadd.f32 %v318, %v341
        %343 = vdwg.mxu0
        %v344 = vtanh.pop %v342
        %v345 = vld [vmem:[%s3] sm:$0xff]
        %v346 = vld [vmem:[%s3 + $0x8] sm:$0xff]
        %v347 = vld [vmem:[%s3 + $0x10] sm:$0xff]
        %v348 = vld [vmem:[%s3 + $0x18] sm:$0xff]
        %v349 = vld [vmem:[%s3 + $0x20] sm:$0xff]
        %v350 = vld [vmem:[%s3 + $0x28] sm:$0xff]
        %v351 = vld [vmem:[%s3 + $0x30] sm:$0xff]
        %v352 = vld [vmem:[%s3 + $0x38] sm:$0xff]
        %v353 = vld [vmem:[%s3 + $0x40] sm:$0xff]
        %v354 = vld [vmem:[%s3 + $0x48] sm:$0xff]
        %v355 = vld [vmem:[%s3 + $0x50] sm:$0xff]
        %v356 = vld [vmem:[%s3 + $0x58] sm:$0xff]
        %v357 = vld [vmem:[%s3 + $0x60] sm:$0xff]
        %v358 = vld [vmem:[%s3 + $0x68] sm:$0xff]
        %v359 = vld [vmem:[%s3 + $0x70] sm:$0xff]
        %v360 = vld [vmem:[%s3 + $0x78] sm:$0xff]
        %v361 = vld [vmem:[%s4] sm:$0x1]
        %v363 = vperm.slane %v361, 0
        %365 = vmatpush.msra.mxu0 %v360
        %366 = vmatpush.msra.mxu0 %v359
        %367 = vmatpush.msra.mxu0 %v358
        %368 = vmatpush.msra.mxu0 %v357
        %369 = vmatpush.msra.mxu0 %v356
        %370 = vmatpush.msra.mxu0 %v355
        %371 = vmatpush.msra.mxu0 %v354
        %372 = vmatpush.msra.mxu0 %v353
        %373 = vmatpush.msra.mxu0 %v352
        %374 = vmatpush.msra.mxu0 %v351
        %375 = vmatpush.msra.mxu0 %v350
        %376 = vmatpush.msra.mxu0 %v349
        %377 = vmatpush.msra.mxu0 %v348
        %378 = vmatpush.msra.mxu0 %v347
        %379 = vmatpush.msra.mxu0 %v346
        %380 = vmatpush.msra.mxu0 %v345
        %381 = vmatmul.f32.gmra.mxu0 %v344
        %v382 = vpop.f32.mrf.mxu0
        %v383 = vadd.f32 %v363, %v382
        %384 = vdwg.mxu0
        %v385 = vtanh.pop %v383
        %v386 = vld [vmem:[%s5] sm:$0xff]
        %v387 = vld [vmem:[%s5 + $0x8] sm:$0xff]
        %v388 = vld [vmem:[%s5 + $0x10] sm:$0xff]
        %v389 = vld [vmem:[%s5 + $0x18] sm:$0xff]
        %v390 = vld [vmem:[%s5 + $0x20] sm:$0xff]
        %v391 = vld [vmem:[%s5 + $0x28] sm:$0xff]
        %v392 = vld [vmem:[%s5 + $0x30] sm:$0xff]
        %v393 = vld [vmem:[%s5 + $0x38] sm:$0xff]
        %v394 = vld [vmem:[%s5 + $0x40] sm:$0xff]
        %v395 = vld [vmem:[%s5 + $0x48] sm:$0xff]
        %v396 = vld [vmem:[%s5 + $0x50] sm:$0xff]
        %v397 = vld [vmem:[%s5 + $0x58] sm:$0xff]
        %v398 = vld [vmem:[%s5 + $0x60] sm:$0xff]
        %v399 = vld [vmem:[%s5 + $0x68] sm:$0xff]
        %v400 = vld [vmem:[%s5 + $0x70] sm:$0xff]
        %v401 = vld [vmem:[%s5 + $0x78] sm:$0xff]
        %v402 = vld [vmem:[%s6] sm:$0x1]
        %v404 = vperm.slane %v402, 0
        %406 = vmatpush.msra.mxu0 %v401
        %407 = vmatpush.msra.mxu0 %v400
        %408 = vmatpush.msra.mxu0 %v399
        %409 = vmatpush.msra.mxu0 %v398
        %410 = vmatpush.msra.mxu0 %v397
        %411 = vmatpush.msra.mxu0 %v396
        %412 = vmatpush.msra.mxu0 %v395
        %413 = vmatpush.msra.mxu0 %v394
        %414 = vmatpush.msra.mxu0 %v393
        %415 = vmatpush.msra.mxu0 %v392
        %416 = vmatpush.msra.mxu0 %v391
        %417 = vmatpush.msra.mxu0 %v390
        %418 = vmatpush.msra.mxu0 %v389
        %419 = vmatpush.msra.mxu0 %v388
        %420 = vmatpush.msra.mxu0 %v387
        %421 = vmatpush.msra.mxu0 %v386
        %422 = vmatmul.f32.gmra.mxu0 %v385
        %v423 = vpop.f32.mrf.mxu0
        %v424 = vadd.f32 %v404, %v423
        %425 = vdwg.mxu0
        %vm426 = vcmask 48128
        %427 = vst.msk [vmem:[%s312] sm:$0xff] %vm426, %v424
        %p428 = scmp.lt.s32.totalorder %s22, 1
        %s429 = scalar_select %p428, %s22, 1
        %s430 = smul.addr %s429, 8
        %s431 = scalar_lea.vmem %s7, %s430
        // Predicated region
        $region57: #{tpu_custom_call.1} parent=47 // pred_check
          %p432 = pneg %p192
        $region58: #{tpu_custom_call.1} parent=47 // pred_check_branch
          %434 = sbr.rel (%p432) target = $region60
        $region59: #{tpu_custom_call.1} parent=47 // pred_region
          _
        $region60: #{tpu_custom_call.1} parent=47 // pred_fallthru
          _
      $region48: #{tpu_custom_call.1} parent=5 // pred_fallthru
        _
      %p435 = scmp.le.s32.totalorder 2, %s17
      // Predicated region
      $region61: #{tpu_custom_call.1} parent=5 // pred_check
        %p436 = pneg %p435
      $region62: #{tpu_custom_call.1} parent=5 // pred_check_branch
        %438 = sbr.rel (%p436) target = $region64
      $region63: #{tpu_custom_call.1} parent=5 // pred_region
        %s439 = ssub.s32 %s17, 2
        // Predicated region
        $region65: #{tpu_custom_call.1} parent=63 // pred_check
          %p440 = pneg %p198
        $region66: #{tpu_custom_call.1} parent=63 // pred_check_branch
          %442 = sbr.rel (%p440) target = $region68
        $region67: #{tpu_custom_call.1} parent=63 // pred_region
          %p443 = scmp.lt.s32.totalorder %s23, 1
          %s444 = scalar_select %p443, %s23, 1
          %s445 = smul.addr %s444, 8
          %s446 = scalar_lea.vmem %s7, %s445
        $region68: #{tpu_custom_call.1} parent=63 // pred_fallthru
          _
      $region64: #{tpu_custom_call.1} parent=5 // pred_fallthru
        _
    $region6: #{tpu_custom_call.1} parent=1 // loop_footer
      %s21 = sadd.s32 1, %s17
    $region7: #{tpu_custom_call.1} parent=1 // loop_footer_branch
      %16 = sbr.rel target = $region3
    $region8: #{tpu_custom_call.1} parent=1 // loop_exit
      _
    %447 = vsyncpa [#allocation3], 1
    %s448 = scalar_lea.sflag [#allocation3], 1
    %449 = vsyncpa %s448, 1
    %450 = vsyncpa [#allocation5], 1

</llo_original>
